<compile_context>
chip_gen: v5e
topology: v5e:2x2
jax: 0.10.0
libtpu: 0.0.40
codegen_flags: <defaults>
</compile_context>

<pallas_src>
import functools

import jax
import jax.numpy as jnp
from jax import lax
from jax.experimental import pallas as pl
from jax.experimental.pallas import tpu as pltpu


# ------------------------------------------------------------------
# tile pickers (respect the (8, 128) block constraints)
# ------------------------------------------------------------------
def _tile_major(n, target):
    """Largest multiple-of-8 divisor of n that is <= target, else n (full dim)."""
    if n <= target:
        return n
    t = target - (target % 8)
    while t >= 8:
        if n % t == 0:
            return t
        t -= 8
    return n


def _tile_lane(n, target):
    """Largest multiple-of-128 divisor of n that is <= target, else n (full dim)."""
    if n <= target:
        return n
    t = target - (target % 128)
    while t >= 128:
        if n % t == 0:
            return t
        t -= 128
    return n


_VMEM_LIMIT = 48 * 1024 * 1024  # headroom below v7x's 64 MiB physical VMEM


# ------------------------------------------------------------------
# Kernel 1: LayerNorm over the feature (last) dim
# ------------------------------------------------------------------
def _layernorm_kernel(x_ref, g_ref, b_ref, o_ref, *, eps):
    x = x_ref[0].astype(jnp.float32)                      # (tm, F)
    mu = jnp.mean(x, axis=-1, keepdims=True)
    xc = x - mu
    var = jnp.mean(xc * xc, axis=-1, keepdims=True)
    inv = lax.rsqrt(var + eps)
    y = xc * inv * g_ref[...].astype(jnp.float32) + b_ref[...].astype(jnp.float32)
    o_ref[0] = y.astype(o_ref.dtype)


def _layernorm(x, gamma, beta, eps=1e-5):
    B, N, F = x.shape
    tm = _tile_major(N, 512)
    g2 = gamma.reshape(1, F)
    b2 = beta.reshape(1, F)
    return pl.pallas_call(
        functools.partial(_layernorm_kernel, eps=eps),
        out_shape=jax.ShapeDtypeStruct((B, N, F), x.dtype),
        grid_spec=pltpu.PrefetchScalarGridSpec(
            num_scalar_prefetch=0,
            grid=(B, N // tm),
            in_specs=[
                pl.BlockSpec((1, tm, F), lambda b, i: (b, i, 0)),
                pl.BlockSpec((1, F), lambda b, i: (0, 0)),
                pl.BlockSpec((1, F), lambda b, i: (0, 0)),
            ],
            out_specs=pl.BlockSpec((1, tm, F), lambda b, i: (b, i, 0)),
        ),
        compiler_params=pltpu.CompilerParams(
            dimension_semantics=("parallel", "parallel"),
        ),
    )(x, g2, b2)


# ------------------------------------------------------------------
# Kernel 2: tiled linear  y = x @ W   (bias-free nn.Linear)
#   x: (B, N, IN), W: (IN, OUT) -> (B, N, OUT); K axis last, f32 accumulator.
# ------------------------------------------------------------------
def _linear_kernel(x_ref, w_ref, o_ref, acc_ref):
    @pl.when(pl.program_id(3) == 0)
    def _init():
        acc_ref[...] = jnp.zeros(acc_ref.shape, dtype=acc_ref.dtype)

    acc_ref[...] += jnp.dot(x_ref[0], w_ref[...],
                            preferred_element_type=jnp.float32)

    @pl.when(pl.program_id(3) == pl.num_programs(3) - 1)
    def _finalize():
        o_ref[0] = acc_ref[...].astype(o_ref.dtype)


def _linear(x, w):
    B, N, IN = x.shape
    OUT = w.shape[1]
    w = w.astype(x.dtype)            # keep MXU operands in the activation dtype
    tm = _tile_major(N, 256)
    tn = _tile_lane(OUT, 256)
    tk = _tile_lane(IN, 512)
    return pl.pallas_call(
        _linear_kernel,
        out_shape=jax.ShapeDtypeStruct((B, N, OUT), x.dtype),
        grid_spec=pltpu.PrefetchScalarGridSpec(
            num_scalar_prefetch=0,
            grid=(B, N // tm, OUT // tn, IN // tk),
            in_specs=[
                pl.BlockSpec((1, tm, tk), lambda b, i, j, kk: (b, i, kk)),
                pl.BlockSpec((tk, tn), lambda b, i, j, kk: (kk, j)),
            ],
            out_specs=pl.BlockSpec((1, tm, tn), lambda b, i, j, kk: (b, i, j)),
            scratch_shapes=[pltpu.VMEM((tm, tn), jnp.float32)],
        ),
        compiler_params=pltpu.CompilerParams(
            dimension_semantics=("parallel", "parallel", "parallel", "arbitrary"),
            vmem_limit_bytes=_VMEM_LIMIT,
        ),
    )(x, w)


# ------------------------------------------------------------------
# Kernel 3: flash-style multi-head attention in native (B, N, H*D) layout
# ------------------------------------------------------------------
def _flash_attn_kernel(q_ref, k_ref, v_ref, o_ref, m_ref, l_ref, acc_ref,
                       *, num_heads, head_dim, scale):
    ki = pl.program_id(2)

    @pl.when(ki == 0)
    def _init():
        m_ref[...] = jnp.full(m_ref.shape, -jnp.inf, dtype=m_ref.dtype)
        l_ref[...] = jnp.zeros(l_ref.shape, dtype=l_ref.dtype)
        acc_ref[...] = jnp.zeros(acc_ref.shape, dtype=acc_ref.dtype)

    # Native-layout tiles; softmax scale folded into q (O(N*D) VPU work).
    scale_c = jnp.asarray(scale, dtype=q_ref.dtype)
    q = q_ref[0] * scale_c                               # (tq,  H*D) input dtype
    k = k_ref[0]                                         # (tkv, H*D)
    v = v_ref[0]                                         # (tkv, H*D)

    for h in range(num_heads):
        sl = slice(h * head_dim, (h + 1) * head_dim)
        qh, kh, vh = q[:, sl], k[:, sl], v[:, sl]        # (tq,D), (tkv,D), (tkv,D)

        # QK^T without transposing K: contract the last dims on the MXU.
        s = lax.dot_general(qh, kh, (((1,), (1,)), ((), ())),
                            preferred_element_type=jnp.float32)   # (tq, tkv) f32

        m_prev = m_ref[h]                                # (tq, 1) f32
        l_prev = l_ref[h]
        m_new = jnp.maximum(m_prev, jnp.max(s, axis=-1, keepdims=True))
        alpha = jnp.exp(m_prev - m_new)
        p = jnp.exp(s - m_new)                           # (tq, tkv) f32
        l_ref[h] = alpha * l_prev + jnp.sum(p, axis=-1, keepdims=True)
        acc_ref[h] = alpha * acc_ref[h] + jnp.dot(
            p.astype(vh.dtype), vh, preferred_element_type=jnp.float32)
        m_ref[h] = m_new

    @pl.when(ki == pl.num_programs(2) - 1)
    def _finalize():
        outs = []
        for h in range(num_heads):
            inv_l = pl.reciprocal(l_ref[h], approx=True)  # EUP slot, ~free
            outs.append(acc_ref[h] * inv_l)               # (tq, D) f32
        # single lane-dense store in the original (B, N, H*D) layout
        o_ref[0] = jnp.concatenate(outs, axis=-1).astype(o_ref.dtype)


def _flash_attention(q, k, v, *, num_heads, scale):
    B, N, MID = q.shape
    D = MID // num_heads
    tq = _tile_major(N, 256)    # sized for v7x's 64 MiB VMEM
    tkv = _tile_major(N, 512)

    return pl.pallas_call(
        functools.partial(_flash_attn_kernel, num_heads=num_heads,
                          head_dim=D, scale=scale),
        out_shape=jax.ShapeDtypeStruct((B, N, MID), q.dtype),
        grid_spec=pltpu.PrefetchScalarGridSpec(
            num_scalar_prefetch=0,
            grid=(B, N // tq, N // tkv),
            in_specs=[
                pl.BlockSpec((1, tq, MID), lambda b, i, j: (b, i, 0)),
                pl.BlockSpec((1, tkv, MID), lambda b, i, j: (b, j, 0)),
                pl.BlockSpec((1, tkv, MID), lambda b, i, j: (b, j, 0)),
            ],
            out_specs=pl.BlockSpec((1, tq, MID), lambda b, i, j: (b, i, 0)),
            scratch_shapes=[
                pltpu.VMEM((num_heads, tq, 1), jnp.float32),   # m
                pltpu.VMEM((num_heads, tq, 1), jnp.float32),   # l
                pltpu.VMEM((num_heads, tq, D), jnp.float32),   # acc
            ],
        ),
        compiler_params=pltpu.CompilerParams(
            dimension_semantics=("parallel", "parallel", "arbitrary"),
            vmem_limit_bytes=_VMEM_LIMIT,
        ),
    )(q, k, v)


# ------------------------------------------------------------------
# Attention module (JAX / Pallas port of the PyTorch module)
# ------------------------------------------------------------------
class Attention:
    def __init__(self, features, *, head_features, num_heads, out_features=None,
                 context_features=None, causal=False, key=None):
        if causal:
            raise NotImplementedError("TODO(synk): causal masking not implemented")
        self.scale = head_features ** (-0.5)
        self.num_heads = num_heads
        self.context_features = context_features
        mid = head_features * num_heads
        ctx_feats = features if context_features is None else context_features
        out_feats = features if out_features is None else out_features
        if key is None:
            key = jax.random.PRNGKey(0)
        ks = jax.random.split(key, 7)

        def linear_w(k, fan_in, fan_out):  # nn.Linear(bias=False)-style init, stored (in, out)
            bound = fan_in ** (-0.5)
            return jax.random.uniform(k, (fan_in, fan_out), jnp.float32,
                                      minval=-bound, maxval=bound)

        self.w_q = linear_w(ks[0], features, mid)
        w_kv = linear_w(ks[1], ctx_feats, 2 * mid)
        self.w_k = w_kv[:, :mid]          # matches torch.chunk(to_kv(ctx), 2, dim=-1)
        self.w_v = w_kv[:, mid:]
        self.w_out = linear_w(ks[2], mid, out_feats)
        self.g_x = 1.0 + 0.1 * jax.random.normal(ks[3], (features,), jnp.float32)
        self.b_x = 0.1 * jax.random.normal(ks[4], (features,), jnp.float32)
        self.g_c = 1.0 + 0.1 * jax.random.normal(ks[5], (ctx_feats,), jnp.float32)
        self.b_c = 0.1 * jax.random.normal(ks[6], (ctx_feats,), jnp.float32)

    def __call__(self, x, context=None, mask=None):
        if self.context_features is not None:
            assert context is not None, \
                "You must provide a context when using context_features"
        # TODO(synk): mask / causal / cross masking not implemented (dense attention only).
        assert mask is None, "mask is not supported in this Pallas port"
        context = x if context is None else context

        xn = _layernorm(x, self.g_x, self.b_x)
        cn = _layernorm(context, self.g_c, self.b_c)
        q = _linear(xn, self.w_q)
        k = _linear(cn, self.w_k)
        v = _linear(cn, self.w_v)
        o = _flash_attention(q, k, v, num_heads=self.num_heads, scale=self.scale)
        return _linear(o, self.w_out)


# ------------------------------------------------------------------
# pure-JAX reference (mirrors the PyTorch forward) for sanity check
# ------------------------------------------------------------------
def _reference(x, m, eps=1e-5):
    def ln(t, g, b):
        mu = jnp.mean(t, axis=-1, keepdims=True)
        var = jnp.mean((t - mu) ** 2, axis=-1, keepdims=True)
        return (t - mu) / jnp.sqrt(var + eps) * g + b

    xn = ln(x, m.g_x, m.b_x)
    cn = ln(x, m.g_c, m.b_c)                 # context = x (self-attention)
    q, k, v = xn @ m.w_q, cn @ m.w_k, cn @ m.w_v
    B, N, MID = q.shape
    H = m.num_heads
    D = MID // H
    qh = jnp.transpose(q.reshape(B, N, H, D), (0, 2, 1, 3))
    kh = jnp.transpose(k.reshape(B, N, H, D), (0, 2, 1, 3))
    vh = jnp.transpose(v.reshape(B, N, H, D), (0, 2, 1, 3))
    sim = jnp.einsum("bhnd,bhmd->bhnm", qh, kh) * m.scale
    attn = jax.nn.softmax(sim.astype(jnp.float32), axis=-1)
    out = jnp.einsum("bhnm,bhmd->bhnd", attn, vh)
    out = jnp.transpose(out, (0, 2, 1, 3)).reshape(B, N, MID)
    return out @ m.w_out


if __name__ == "__main__":
    B, N = 2, 8
    features = 32
    head_features = 16
    num_heads = 2

    key = jax.random.PRNGKey(0)
    kx, kp = jax.random.split(key)
    x = jax.random.normal(kx, (B, N, features), jnp.float32)

    module = Attention(features, head_features=head_features,
                       num_heads=num_heads, key=kp)

    y = module(x)
    jax.block_until_ready(y)

    y_ref = _reference(x, module)
    assert y.shape == (B, N, features)
    # approx reciprocal (EUP) loosens agreement slightly vs the exact f32 reference
    assert jnp.allclose(y, y_ref, atol=2e-2, rtol=2e-2), "mismatch vs reference"

    print("KERNEL_OK")
</pallas_src>

<mosaic_0001>
module attributes {stable_mosaic.version = 11 : i64} {
  func.func @_layernorm_kernel(%arg0: i32, %arg1: i32, %arg2: memref<1x8x32xf32, #tpu.memory_space<vmem>>, %arg3: memref<1x32xf32, #tpu.memory_space<vmem>>, %arg4: memref<1x32xf32, #tpu.memory_space<vmem>>, %arg5: memref<1x8x32xf32, #tpu.memory_space<vmem>>) attributes {dimension_semantics = [#tpu.dimension_semantics<parallel>, #tpu.dimension_semantics<parallel>], iteration_bounds = array<i64: 2, 1>, scalar_prefetch = 0 : i64, scratch_operands = 0 : i64, tpu.core_type = #tpu.core_type<tc>, window_params = [{transform_indices = @transform_0, window_bounds = array<i64: 1, 8, 32>}, {pipeline_mode = #tpu.pipeline_mode<synchronous>, transform_indices = @transform_1, window_bounds = array<i64: 1, 32>}, {pipeline_mode = #tpu.pipeline_mode<synchronous>, transform_indices = @transform_2, window_bounds = array<i64: 1, 32>}, {transform_indices = @transform_3, window_bounds = array<i64: 1, 8, 32>}]} {
    %c0 = arith.constant 0 : index
    %c0_0 = arith.constant 0 : index
    %c0_1 = arith.constant 0 : index
    %0 = vector.load %arg2[%c0, %c0_0, %c0_1] : memref<1x8x32xf32, #tpu.memory_space<vmem>>, vector<1x8x32xf32>
    %1 = vector.shape_cast %0 : vector<1x8x32xf32> to vector<8x32xf32>
    %cst = arith.constant dense<0.000000e+00> : vector<8xf32>
    %2 = vector.multi_reduction <add>, %1, %cst [1] : vector<8x32xf32> to vector<8xf32>
    %3 = vector.shape_cast %2 : vector<8xf32> to vector<8x1xf32>
    %cst_2 = arith.constant 3.200000e+01 : f32
    %4 = vector.broadcast %cst_2 : f32 to vector<8x1xf32>
    %5 = arith.divf %3, %4 : vector<8x1xf32>
    %6 = vector.broadcast %5 : vector<8x1xf32> to vector<8x32xf32>
    %7 = arith.subf %1, %6 : vector<8x32xf32>
    %8 = arith.mulf %7, %7 : vector<8x32xf32>
    %cst_3 = arith.constant dense<0.000000e+00> : vector<8xf32>
    %9 = vector.multi_reduction <add>, %8, %cst_3 [1] : vector<8x32xf32> to vector<8xf32>
    %10 = vector.shape_cast %9 : vector<8xf32> to vector<8x1xf32>
    %cst_4 = arith.constant 3.200000e+01 : f32
    %11 = vector.broadcast %cst_4 : f32 to vector<8x1xf32>
    %12 = arith.divf %10, %11 : vector<8x1xf32>
    %cst_5 = arith.constant 9.99999974E-6 : f32
    %13 = vector.broadcast %cst_5 : f32 to vector<8x1xf32>
    %14 = arith.addf %12, %13 : vector<8x1xf32>
    %15 = math.rsqrt %14 : vector<8x1xf32>
    %16 = vector.broadcast %15 : vector<8x1xf32> to vector<8x32xf32>
    %17 = arith.mulf %7, %16 : vector<8x32xf32>
    %c0_6 = arith.constant 0 : index
    %c0_7 = arith.constant 0 : index
    %18 = vector.load %arg3[%c0_6, %c0_7] : memref<1x32xf32, #tpu.memory_space<vmem>>, vector<1x32xf32>
    %19 = vector.broadcast %18 : vector<1x32xf32> to vector<8x32xf32>
    %20 = arith.mulf %17, %19 : vector<8x32xf32>
    %c0_8 = arith.constant 0 : index
    %c0_9 = arith.constant 0 : index
    %21 = vector.load %arg4[%c0_8, %c0_9] : memref<1x32xf32, #tpu.memory_space<vmem>>, vector<1x32xf32>
    %22 = vector.broadcast %21 : vector<1x32xf32> to vector<8x32xf32>
    %23 = arith.addf %20, %22 : vector<8x32xf32>
    %c0_10 = arith.constant 0 : index
    %c0_11 = arith.constant 0 : index
    %c0_12 = arith.constant 0 : index
    %24 = vector.load %arg5[%c0_10, %c0_11, %c0_12] : memref<1x8x32xf32, #tpu.memory_space<vmem>>, vector<1x8x32xf32>
    %25 = vector.shape_cast %24 : vector<1x8x32xf32> to vector<8x32xf32>
    %26 = vector.shape_cast %23 : vector<8x32xf32> to vector<1x8x32xf32>
    tpu.vector_store %arg5[%c0_10, %c0_11, %c0_12], %26 {strides = array<i32>} : memref<1x8x32xf32, #tpu.memory_space<vmem>>, vector<1x8x32xf32>,
    return
  }
  func.func @transform_0(%arg0: i32, %arg1: i32) -> (i32, i32, i32) {
    %c0_i32 = arith.constant 0 : i32
    %c0_i32_0 = arith.constant 0 : i32
    return %arg0, %arg1, %c0_i32 : i32, i32, i32
  }
  func.func @transform_1(%arg0: i32, %arg1: i32) -> (i32, i32) {
    %c0_i32 = arith.constant 0 : i32
    %c0_i32_0 = arith.constant 0 : i32
    %c0_i32_1 = arith.constant 0 : i32
    return %c0_i32, %c0_i32_0 : i32, i32
  }
  func.func @transform_2(%arg0: i32, %arg1: i32) -> (i32, i32) {
    %c0_i32 = arith.constant 0 : i32
    %c0_i32_0 = arith.constant 0 : i32
    %c0_i32_1 = arith.constant 0 : i32
    return %c0_i32, %c0_i32_0 : i32, i32
  }
  func.func @transform_3(%arg0: i32, %arg1: i32) -> (i32, i32, i32) {
    %c0_i32 = arith.constant 0 : i32
    %c0_i32_0 = arith.constant 0 : i32
    return %arg0, %arg1, %c0_i32 : i32, i32, i32
  }
}

</mosaic_0001>

<llo_original>
// kernel: tpu_custom_call.1
$region0: #{tpu_custom_call.1}
  #allocation0 [shape = 'u32[]', space=smem, size = 0x4, offset = 0x4, fixed_abs, tag = 'smem constant byte address 0x4 - core index']
  #allocation1 [shape = 'u32[72,128]{1,0:T(1,128)}', space=vmem, size = 0x9000, scoped, tag = 'internal scratch']
  %s0 = inlined_call_operand.hbm [shape: f32[2,8,32], index: 0, kind: input, shape index: {}]
  %s1 = inlined_call_operand.hbm [shape: f32[1,32], index: 1, kind: input, shape index: {}]
  %s2 = inlined_call_operand.vmem [shape: f32[1,32], index: 2, kind: input, shape index: {}]
  %s3 = inlined_call_operand.hbm [shape: f32[2,8,32], index: 3, kind: output, shape index: {}]
  %s4 = sld [smem:[#allocation0]]
  $region53: #{tpu_custom_call.1} parent=0
    _
  %s6 = ssub.s32 1, %s4
  %s7 = scalar_select 0, %s6, %s4
  $region1: #{tpu_custom_call.1} parent=0
    #allocation2 [shape = 'u8[8192]{0}', space=vmem, size = 0x2000, scoped, tag = 'input window, operand 0']
    #allocation3 [shape = 's32[2]{0}', space=sflag, size = 0x8, scoped, tag = 'scoped memory for tpu_custom_call.1']
    #allocation4 [shape = 's32[2]{0}', space=sflag, size = 0x8, scoped, tag = 'scoped memory for tpu_custom_call.1']
    #allocation5 [shape = 'u8[512]{0}', space=vmem, size = 0x400, scoped, tag = 'input window, operand 1, single buffered']
    #allocation6 [shape = 's32[1]{0}', space=sflag, size = 0x4, scoped, tag = 'scoped memory for tpu_custom_call.1']
    #allocation7 [shape = 'u8[8192]{0}', space=vmem, size = 0x2000, scoped, tag = 'output window, operand 0']
    %8 = vsyncpa [#allocation3], 0
    %s9 = scalar_lea.sflag [#allocation3], 1
    %10 = vsyncpa %s9, 0
    %11 = vsyncpa [#allocation6], 0
    %12 = vsyncpa [#allocation4], 0
    %s13 = scalar_lea.sflag [#allocation4], 1
    %14 = vsyncpa %s13, 0
    loop: start=0, step=1, limit=4
    $region2: #{tpu_custom_call.1} parent=1 // loop_pre_header
      _
    $region3: #{tpu_custom_call.1} parent=1 // loop_header
      %s16 = sphi 0, %s20
      %p17 = scmp.ge.s32.totalorder %s16, 4
      %s23 = sphi 0, %s35
      %s24 = sphi 0, %s31
      %s25 = sphi 0, %s23
      %s26 = sphi 0, %s24
      %s27 = sphi 0, %s25
      %s28 = sphi 0, %s26
      %s40 = sphi 0, %s42
      %s43 = sphi 0, %s40
      %s44 = sphi 0, %s43
      %s60 = sphi 0, %s44
      %s64 = sphi 0, %s64
      %s66 = sphi 0, %s64
      %s67 = sphi 0, %s66
      %s81 = sphi 0, %s67
      %s85 = sphi 0, %s85
      %s87 = sphi 0, %s85
      %s88 = sphi 0, %s87
      %s102 = sphi 0, %s88
      %s110 = sphi 0, %s112
      %s113 = sphi 0, %s110
      %s114 = sphi 0, %s113
      %s130 = sphi 0, %s114
    $region4: #{tpu_custom_call.1} parent=1 // loop_header_branch
      %19 = sbr.rel (%p17) target = $region8
    $region5: #{tpu_custom_call.1} parent=1 // loop_body
      %s21 = ssub.s32 %s16, 1
      %s22 = ssub.s32 %s16, 2
      %s29 = sadd.s32 1, %s24
      %p30 = scmp.ge.s32.totalorder %s29, 1
      %s31 = scalar_select %p30, 0, %s29
      %s32 = sadd.s32 1, %s23
      %s33 = scalar_select %p30, %s32, %s23
      %p34 = scmp.ge.s32.totalorder %s33, 2
      %s35 = scalar_select %p34, 0, %s33
      %s36 = ssub.s32 %s23, %s35
      %s37 = ssub.s32 %s24, %s31
      %s38 = sor.u32 %s36, %s37
      %p39 = scmp.eq.s32.totalorder %s38, 0
      %s41 = sadd.s32 %s40, 1
      %s42 = scalar_select %p39, %s40, %s41
      %p45 = pneg %p39
      %p46 = scmp.eq.s32.totalorder %s16, 1
      %p47 = por %p45, %p46
      %p48 = scmp.ne.s32.totalorder %s40, %s43
      %p49 = scmp.eq.s32.totalorder %s16, 0
      %p50 = por %p48, %p49
      %p51 = scmp.ne.s32.totalorder %s40, %s43
      %p52 = scmp.eq.s32.totalorder %s21, 1
      %p53 = por %p51, %p52
      %p54 = scmp.ne.s32.totalorder %s43, %s44
      %p55 = scmp.eq.s32.totalorder %s21, 0
      %p56 = por %p54, %p55
      %p57 = scmp.ne.s32.totalorder %s43, %s44
      %p58 = scmp.eq.s32.totalorder %s22, 1
      %p59 = por %p57, %p58
      %p61 = scmp.ne.s32.totalorder %s44, %s60
      %p62 = scmp.eq.s32.totalorder %s22, 0
      %p63 = por %p61, %p62
      %s65 = sadd.s32 %s64, 1
      %p68 = scmp.eq.s32.totalorder %s16, 1
      %p69 = scmp.ne.s32.totalorder %s64, %s66
      %p70 = scmp.eq.s32.totalorder %s16, 0
      %p71 = por %p69, %p70
      %p72 = scmp.ne.s32.totalorder %s64, %s66
      %p73 = scmp.eq.s32.totalorder %s21, 1
      %p74 = por %p72, %p73
      %p75 = scmp.ne.s32.totalorder %s66, %s67
      %p76 = scmp.eq.s32.totalorder %s21, 0
      %p77 = por %p75, %p76
      %p78 = scmp.ne.s32.totalorder %s66, %s67
      %p79 = scmp.eq.s32.totalorder %s22, 1
      %p80 = por %p78, %p79
      %p82 = scmp.ne.s32.totalorder %s67, %s81
      %p83 = scmp.eq.s32.totalorder %s22, 0
      %p84 = por %p82, %p83
      %s86 = sadd.s32 %s85, 1
      %p89 = scmp.eq.s32.totalorder %s16, 1
      %p90 = scmp.ne.s32.totalorder %s85, %s87
      %p91 = scmp.eq.s32.totalorder %s16, 0
      %p92 = por %p90, %p91
      %p93 = scmp.ne.s32.totalorder %s85, %s87
      %p94 = scmp.eq.s32.totalorder %s21, 1
      %p95 = por %p93, %p94
      %p96 = scmp.ne.s32.totalorder %s87, %s88
      %p97 = scmp.eq.s32.totalorder %s21, 0
      %p98 = por %p96, %p97
      %p99 = scmp.ne.s32.totalorder %s87, %s88
      %p100 = scmp.eq.s32.totalorder %s22, 1
      %p101 = por %p99, %p100
      %p103 = scmp.ne.s32.totalorder %s88, %s102
      %p104 = scmp.eq.s32.totalorder %s22, 0
      %p105 = por %p103, %p104
      %s106 = ssub.s32 %s23, %s35
      %s107 = ssub.s32 %s24, %s31
      %s108 = sor.u32 %s106, %s107
      %p109 = scmp.eq.s32.totalorder %s108, 0
      %s111 = sadd.s32 %s110, 1
      %s112 = scalar_select %p109, %s110, %s111
      %p115 = pneg %p109
      %p116 = scmp.eq.s32.totalorder %s16, 1
      %p117 = por %p115, %p116
      %p118 = scmp.ne.s32.totalorder %s110, %s113
      %p119 = scmp.eq.s32.totalorder %s16, 0
      %p120 = por %p118, %p119
      %p121 = scmp.ne.s32.totalorder %s110, %s113
      %p122 = scmp.eq.s32.totalorder %s21, 1
      %p123 = por %p121, %p122
      %p124 = scmp.ne.s32.totalorder %s113, %s114
      %p125 = scmp.eq.s32.totalorder %s21, 0
      %p126 = por %p124, %p125
      %p127 = scmp.ne.s32.totalorder %s113, %s114
      %p128 = scmp.eq.s32.totalorder %s22, 1
      %p129 = por %p127, %p128
      %p131 = scmp.ne.s32.totalorder %s114, %s130
      %p132 = scmp.eq.s32.totalorder %s22, 0
      %p133 = por %p131, %p132
      %p134 = scmp.le.s32.totalorder 1, %s16
      %p135 = scmp.lt.s32.totalorder %s16, 3
      %p136 = pnand %p134, %p135
      %p137 = pneg %p136
      // Predicated region
      $region9: #{tpu_custom_call.1} parent=5 // pred_check
        _
      $region10: #{tpu_custom_call.1} parent=5 // pred_check_branch
        %139 = sbr.rel (%p136) target = $region12
      $region11: #{tpu_custom_call.1} parent=5 // pred_region
        %s140 = ssub.s32 %s16, 1
        // Predicated region
        $region13: #{tpu_custom_call.1} parent=11 // pred_check
          %p141 = pneg %p77
        $region14: #{tpu_custom_call.1} parent=11 // pred_check_branch
          %143 = sbr.rel (%p141) target = $region16
        $region15: #{tpu_custom_call.1} parent=11 // pred_region
          %145 = vsyncadd [#allocation6], 0
          %s147 = sshll.u32 %s1, 4
          %s148 = int_to_ptr.hbm [resolvable:$true] %s147
          %s149 = sshll.u32 [#allocation5], 4
          %s150 = int_to_ptr.vmem [resolvable:$true] %s149
          %152 = dma.hbm_to_vmem [thread:$0]  %s148, 16, %s150, [#allocation6]
        $region16: #{tpu_custom_call.1} parent=11 // pred_fallthru
          _
        // Predicated region
        $region17: #{tpu_custom_call.1} parent=11 // pred_check
          %p153 = pneg %p98
        $region18: #{tpu_custom_call.1} parent=11 // pred_check_branch
          %155 = sbr.rel (%p153) target = $region20
        $region19: #{tpu_custom_call.1} parent=11 // pred_region
          _
        $region20: #{tpu_custom_call.1} parent=11 // pred_fallthru
          _
      $region12: #{tpu_custom_call.1} parent=5 // pred_fallthru
        _
      %p156 = scmp.lt.s32.totalorder %s16, 2
      // Predicated region
      $region21: #{tpu_custom_call.1} parent=5 // pred_check
        %p157 = pneg %p156
      $region22: #{tpu_custom_call.1} parent=5 // pred_check_branch
        %159 = sbr.rel (%p157) target = $region24
      $region23: #{tpu_custom_call.1} parent=5 // pred_region
        // Predicated region
        $region25: #{tpu_custom_call.1} parent=23 // pred_check
          %p160 = pneg %p50
        $region26: #{tpu_custom_call.1} parent=23 // pred_check_branch
          %162 = sbr.rel (%p160) target = $region28
        $region27: #{tpu_custom_call.1} parent=23 // pred_region
          %s163 = sand.u32 %s40, 1
          %s164 = scalar_lea.sflag [#allocation3], %s163
          %s165 = sand.u32 %s40, 1
          %s166 = smul.addr %s165, 8
          %s167 = scalar_lea.vmem [#allocation2], %s166
          %169 = vsyncadd %s164, 0
          %s170 = sadd.s32 %s24, %s23
          %s171 = smul.addr %s170, 8
          %s172 = scalar_lea.hbm %s0, %s171
          %s174 = sshll.u32 %s172, 4
          %s175 = int_to_ptr.hbm [resolvable:$true] %s174
          %s176 = sshll.u32 %s167, 4
          %s177 = int_to_ptr.vmem [resolvable:$true] %s176
          %179 = dma.hbm_to_vmem [thread:$0]  %s175, 128, %s177, %s164
        $region28: #{tpu_custom_call.1} parent=23 // pred_fallthru
          _
      $region24: #{tpu_custom_call.1} parent=5 // pred_fallthru
        _
      %p180 = scmp.le.s32.totalorder 1, %s16
      %p181 = scmp.lt.s32.totalorder %s16, 3
      %p182 = pnand %p180, %p181
      %p183 = pneg %p182
      // Predicated region
      $region29: #{tpu_custom_call.1} parent=5 // pred_check
        _
      $region30: #{tpu_custom_call.1} parent=5 // pred_check_branch
        %185 = sbr.rel (%p182) target = $region32
      $region31: #{tpu_custom_call.1} parent=5 // pred_region
        %s186 = ssub.s32 %s16, 1
        %s187 = sand.u32 %s43, 1
        %s188 = scalar_lea.sflag [#allocation3], %s187
        %s189 = sand.u32 %s43, 1
        %s190 = smul.addr %s189, 8
        %s191 = scalar_lea.vmem [#allocation2], %s190
        // Predicated region
        $region33: #{tpu_custom_call.1} parent=31 // pred_check
          %p192 = pneg %p56
        $region34: #{tpu_custom_call.1} parent=31 // pred_check_branch
          %194 = sbr.rel (%p192) target = $region36
        $region35: #{tpu_custom_call.1} parent=31 // pred_region
          %196 = dma.done %s188, 128
        $region36: #{tpu_custom_call.1} parent=31 // pred_fallthru
          _
        // Predicated region
        $region37: #{tpu_custom_call.1} parent=31 // pred_check
          %p197 = pneg %p77
        $region38: #{tpu_custom_call.1} parent=31 // pred_check_branch
          %199 = sbr.rel (%p197) target = $region40
        $region39: #{tpu_custom_call.1} parent=31 // pred_region
          %201 = dma.done [#allocation6], 16
        $region40: #{tpu_custom_call.1} parent=31 // pred_fallthru
          _
        %s202 = sand.u32 %s43, 1
        %s203 = scalar_lea.sflag [#allocation3], %s202
        %s204 = sand.u32 %s43, 1
        %s205 = smul.addr %s204, 8
        %s206 = scalar_lea.vmem [#allocation2], %s205
        %p207 = pneg %p56
        %p208 = pneg %p53
        %p209 = pneg %p77
        %p210 = pneg %p74
        %p211 = pneg %p98
        %p212 = pneg %p95
        %p213 = pneg %p126
        %p214 = pneg %p123
        %s215 = sand.u32 %s113, 1
        %s216 = scalar_lea.sflag [#allocation4], %s215
        %s217 = sand.u32 %s113, 1
        %s218 = smul.addr %s217, 8
        %s219 = scalar_lea.vmem [#allocation7], %s218
        %v220 = vld [vmem:[%s191] sm:$0xff]
        %vm221 = vcmask 261120
        %v222 = vsel %vm221, %v220, 0.0
        %223 = vadd.xlane.f32.xlu0 %v222
        %v224 = vpop.xlane.xlu0 %223
        %v225 = vrcp.pop 32.0
        %v226 = vmul.f32 32.0, %v225
        %v227 = vsub.f32 1.0, %v226
        %v228 = vmul.f32 %v225, %v227
        %v229 = vadd.f32 %v225, %v228
        %vm230 = vweird.f32 %v225
        %v231 = vsel %vm230, %v225, %v229
        %v232 = vmul.f32 %v224, %v231
        %v233 = vsub.f32 %v220, %v232
        %v234 = vmul.f32 %v233, %v233
        %v235 = vsel %vm221, %v234, 0.0
        %236 = vadd.xlane.f32.xlu0 %v235
        %v237 = vpop.xlane.xlu0 %236
        %v238 = vmul.f32 %v237, %v231
        %v239 = vadd.f32 %v238, 1e-05
        %v240 = vrsqrt.pop %v239
        %v241 = vmul.f32 %v240, %v239
        %v242 = vmul.f32 %v241, %v240
        %v243 = vmul.f32 0.5, %v242
        %v244 = vsub.f32 1.5, %v243
        %v245 = vmul.f32 %v240, %v244
        %vm246 = vweird.f32 %v239
        %vm247 = vweird.f32 %v240
        %vm248 = vmor %vm246, %vm247
        %v249 = vsel %vm248, %v240, %v245
        %v250 = vmul.f32 %v233, %v249
        %v251 = vld [vmem:[#allocation5] sm:$0x1]
        %v253 = vperm.slane %v251, 0
        %v255 = vmul.f32 %v250, %v253
        %v256 = vld [vmem:[%s2] sm:$0x1]
        %v258 = vperm.slane %v256, 0
        %v260 = vadd.f32 %v255, %v258
        %261 = vst.msk [vmem:[%s219] sm:$0xff] %vm221, %v260
        %s262 = sand.u32 %s113, 1
        %s263 = scalar_lea.sflag [#allocation4], %s262
        %s264 = sand.u32 %s113, 1
        %s265 = smul.addr %s264, 8
        %s266 = scalar_lea.vmem [#allocation7], %s265
        // Predicated region
        $region41: #{tpu_custom_call.1} parent=31 // pred_check
          %p267 = pneg %p123
        $region42: #{tpu_custom_call.1} parent=31 // pred_check_branch
          %269 = sbr.rel (%p267) target = $region44
        $region43: #{tpu_custom_call.1} parent=31 // pred_region
          %271 = vsyncadd %s263, 0
          %s272 = sadd.s32 %s26, %s25
          %s273 = smul.addr %s272, 8
          %s274 = scalar_lea.hbm %s3, %s273
          %s276 = sshll.u32 %s266, 4
          %s277 = int_to_ptr.vmem [resolvable:$true] %s276
          %s278 = sshll.u32 %s274, 4
          %s279 = int_to_ptr.hbm [resolvable:$true] %s278
          %281 = dma.vmem_to_hbm [thread:$0]  %s277, 128, %s279, %s263
        $region44: #{tpu_custom_call.1} parent=31 // pred_fallthru
          _
      $region32: #{tpu_custom_call.1} parent=5 // pred_fallthru
        _
      %p282 = scmp.le.s32.totalorder 2, %s16
      // Predicated region
      $region45: #{tpu_custom_call.1} parent=5 // pred_check
        %p283 = pneg %p282
      $region46: #{tpu_custom_call.1} parent=5 // pred_check_branch
        %285 = sbr.rel (%p283) target = $region48
      $region47: #{tpu_custom_call.1} parent=5 // pred_region
        %s286 = ssub.s32 %s16, 2
        // Predicated region
        $region49: #{tpu_custom_call.1} parent=47 // pred_check
          %p287 = pneg %p129
        $region50: #{tpu_custom_call.1} parent=47 // pred_check_branch
          %289 = sbr.rel (%p287) target = $region52
        $region51: #{tpu_custom_call.1} parent=47 // pred_region
          %s290 = sand.u32 %s114, 1
          %s291 = scalar_lea.sflag [#allocation4], %s290
          %s292 = sand.u32 %s114, 1
          %s293 = smul.addr %s292, 8
          %s294 = scalar_lea.vmem [#allocation7], %s293
          %296 = dma.done %s291, 128
        $region52: #{tpu_custom_call.1} parent=47 // pred_fallthru
          _
      $region48: #{tpu_custom_call.1} parent=5 // pred_fallthru
        _
    $region6: #{tpu_custom_call.1} parent=1 // loop_footer
      %s20 = sadd.s32 1, %s16
    $region7: #{tpu_custom_call.1} parent=1 // loop_footer_branch
      %15 = sbr.rel target = $region3
    $region8: #{tpu_custom_call.1} parent=1 // loop_exit
      _
    %297 = vsyncpa [#allocation3], 1
    %s298 = scalar_lea.sflag [#allocation3], 1
    %299 = vsyncpa %s298, 1
    %300 = vsyncpa [#allocation6], 1
    %301 = vsyncpa [#allocation4], 1
    %s302 = scalar_lea.sflag [#allocation4], 1
    %303 = vsyncpa %s302, 1

</llo_original>
